<compile_context>
chip_gen: v7x
topology: tpu7x:2x2x1
jax: 0.10.0
libtpu: 0.0.40
codegen_flags: <defaults>
</compile_context>

<pallas_src>
import functools

import jax
import jax.numpy as jnp
from jax import lax
from jax.experimental import pallas as pl
from jax.experimental.pallas import tpu as pltpu

TR_MAX_DEFAULT = 512      # max rows (of 128 lanes) per batch tile -> 64K lanes / ~1 MiB x-tile
STRIP_ROWS_DEFAULT = 16   # rows per register-resident strip (2048 lanes)


def _affine_planes(vec_planes, w, b, relu):
    """y[j] = sum_k w[j*n_in+k] * vec_planes[k] + b[j] on per-channel (S,128) slabs.

    `w` is a flat row-major list of traced scalars (n_out x n_in), `b` a list of
    n_out scalars. Pure scalar*vreg VPU FMAs; no MXU, no cross-lane work.
    """
    n_out = len(b)
    n_in = len(vec_planes)
    out = []
    for j in range(n_out):
        acc = vec_planes[0] * w[j * n_in]
        for k in range(1, n_in):
            acc = acc + vec_planes[k] * w[j * n_in + k]
        acc = acc + b[j]
        out.append(jnp.maximum(acc, 0.0) if relu else acc)
    return out


@functools.partial(jax.jit, static_argnames=("tr", "tr_max", "strip_rows"))
def dqn_forward(x, params, *, tr=None, tr_max=TR_MAX_DEFAULT,
                strip_rows=STRIP_ROWS_DEFAULT):
    """x: (B, in_features) f32; params: torch-layout weights (out,in), biases (out,).

    Returns (B, num_actions) f32, identical to the PyTorch module's forward.
    """
    B, F = x.shape
    H = params["w1"].shape[0]
    A = params["w4"].shape[0]
    if B == 0:                                   # guard the empty-batch edge case
        return jnp.zeros((0, A), jnp.float32)

    sr = max(8, (strip_rows // 8) * 8)           # strip must be a sublane multiple
    R = pl.cdiv(B, 128)                          # batch rows of 128 lanes

    if tr is None:
        # Enough grid steps that a tile is <= tr_max rows; prefer >=2 steps so
        # both v7x TensorCores get work on the "parallel" batch axis.
        want_steps = max(pl.cdiv(R, max(sr, tr_max)), 2 if R >= 2 * sr else 1)
        tile_rows = max(sr, pl.cdiv(pl.cdiv(R, want_steps), sr) * sr)
    else:
        tile_rows = max(sr, pl.cdiv(tr, sr) * sr)
    n_steps = pl.cdiv(R, tile_rows)
    R_pad = n_steps * tile_rows
    b_pad = R_pad * 128
    n_strips = tile_rows // sr

    # ---- layout plumbing (fused under jit): (B, F) -> channel planes (F, R_pad, 128)
    xt = jnp.pad(x.astype(jnp.float32), ((0, b_pad - B), (0, 0)))
    x_planes = xt.T.reshape(F, R_pad, 128)

    # ---- pack every weight/bias into one SMEM-resident scalar vector
    pieces = [params["w1"], params["b1"], params["w2"], params["b2"],
              params["w4"], params["b4"]]
    packed = jnp.concatenate([p.astype(jnp.float32).reshape(-1) for p in pieces])
    offs, o = [], 0
    for p in pieces:
        offs.append(o)
        o += int(p.size)
    o_w1, o_b1, o_w2, o_b2, o_w4, o_b4 = offs

    def kernel(p_ref, x_ref, o_ref):
        # Loop-invariant scalar reads (SMEM sld), once per grid step.
        w1 = [p_ref[o_w1 + t] for t in range(H * F)]
        b1 = [p_ref[o_b1 + t] for t in range(H)]
        w2 = [p_ref[o_w2 + t] for t in range(H * H)]
        b2 = [p_ref[o_b2 + t] for t in range(H)]
        w4 = [p_ref[o_w4 + t] for t in range(A * H)]
        b4 = [p_ref[o_b4 + t] for t in range(A)]

        def strip_body(s, carry):
            r0 = pl.multiple_of(s * sr, sr)
            xs = [x_ref[k, pl.ds(r0, sr), :] for k in range(F)]   # F x (sr,128)
            h1 = _affine_planes(xs, w1, b1, relu=True)            # H x (sr,128)
            h2 = _affine_planes(h1, w2, b2, relu=True)            # H x (sr,128)
            ys = _affine_planes(h2, w4, b4, relu=False)           # A x (sr,128)
            for a in range(A):
                o_ref[a, pl.ds(r0, sr), :] = ys[a]
            return carry

        lax.fori_loop(0, n_strips, strip_body, 0,
                      unroll=2 if n_strips >= 2 else 1)

    out_planes = pl.pallas_call(
        kernel,
        out_shape=jax.ShapeDtypeStruct((A, R_pad, 128), jnp.float32),
        grid=(n_steps,),
        in_specs=[
            pl.BlockSpec(memory_space=pltpu.MemorySpace.SMEM),        # packed params
            pl.BlockSpec((F, tile_rows, 128), lambda i: (0, i, 0)),   # x-plane tile
        ],
        out_specs=pl.BlockSpec((A, tile_rows, 128), lambda i: (0, i, 0)),
        compiler_params=pltpu.CompilerParams(
            dimension_semantics=("parallel",),
            vmem_limit_bytes=32 * 1024 * 1024,
        ),
    )(packed, x_planes)

    return out_planes.reshape(A, b_pad)[:, :B].T                     # (B, num_actions)


def init_params(key, in_features=4, num_actions=2):
    """Mimics nn.Linear init U(-1/sqrt(fan_in), 1/sqrt(fan_in)).

    Weights are torch-layout (out, in); biases are (out,).
    """
    ks = jax.random.split(key, 6)

    def linear(kw, kb, fan_in, fan_out):
        bound = 1.0 / jnp.sqrt(jnp.float32(fan_in))
        w = jax.random.uniform(kw, (fan_out, fan_in), jnp.float32, -bound, bound)
        b = jax.random.uniform(kb, (fan_out,), jnp.float32, -bound, bound)
        return w, b

    w1, b1 = linear(ks[0], ks[1], in_features, 6)
    w2, b2 = linear(ks[2], ks[3], 6, 6)
    w4, b4 = linear(ks[4], ks[5], 6, num_actions)
    return {"w1": w1, "b1": b1, "w2": w2, "b2": b2, "w4": w4, "b4": b4}


def dqn_reference(x, p):
    """Plain-JAX reference (torch semantics: x @ W.T + b)."""
    h1 = jnp.maximum(x @ p["w1"].T + p["b1"], 0.0)
    h2 = jnp.maximum(h1 @ p["w2"].T + p["b2"], 0.0)
    return h2 @ p["w4"].T + p["b4"]


if __name__ == "__main__":
    key = jax.random.PRNGKey(0)
    k_params, k_x1, k_x2 = jax.random.split(key, 3)

    in_features, num_actions = 4, 2
    params = init_params(k_params, in_features, num_actions)

    # Small batch: single grid step, single strip, padded to one 128-lane row tile.
    x_small = jax.random.normal(k_x1, (8, in_features), jnp.float32)
    out_small = jax.block_until_ready(dqn_forward(x_small, params))
    ref_small = dqn_reference(x_small, params)
    assert out_small.shape == (8, num_actions)
    assert jnp.allclose(out_small, ref_small, atol=1e-5, rtol=1e-5), "small-batch mismatch"

    # Larger, non-multiple-of-128 batch with forced small tiles/strips to exercise
    # the multi-step pipelined grid, the in-tile strip loop, and pad/slice path.
    x_big = jax.random.normal(k_x2, (2500, in_features), jnp.float32)
    out_big = jax.block_until_ready(dqn_forward(x_big, params, tr=16, strip_rows=8))
    ref_big = dqn_reference(x_big, params)
    assert out_big.shape == (2500, num_actions)
    assert jnp.allclose(out_big, ref_big, atol=1e-5, rtol=1e-5), "big-batch mismatch"

    print("KERNEL_OK")
</pallas_src>

<mosaic_0001>
module attributes {stable_mosaic.version = 11 : i64} {
  func.func @kernel(%arg0: i32, %arg1: memref<86xf32, #tpu.memory_space<smem>>, %arg2: memref<4x16x128xf32, #tpu.memory_space<vmem>>, %arg3: memref<2x16x128xf32, #tpu.memory_space<vmem>>) attributes {dimension_semantics = [#tpu.dimension_semantics<parallel>], iteration_bounds = array<i64: 1>, scalar_prefetch = 0 : i64, scratch_operands = 0 : i64, tpu.core_type = #tpu.core_type<tc>, window_params = [{transform_indices = @transform_0, window_bounds = array<i64: 86>}, {transform_indices = @transform_1, window_bounds = array<i64: 4, 16, 128>}, {transform_indices = @transform_2, window_bounds = array<i64: 2, 16, 128>}]} {
    %c0 = arith.constant 0 : index
    %0 = memref.load %arg1[%c0] : memref<86xf32, #tpu.memory_space<smem>>
    %c1 = arith.constant 1 : index
    %1 = memref.load %arg1[%c1] : memref<86xf32, #tpu.memory_space<smem>>
    %c2 = arith.constant 2 : index
    %2 = memref.load %arg1[%c2] : memref<86xf32, #tpu.memory_space<smem>>
    %c3 = arith.constant 3 : index
    %3 = memref.load %arg1[%c3] : memref<86xf32, #tpu.memory_space<smem>>
    %c4 = arith.constant 4 : index
    %4 = memref.load %arg1[%c4] : memref<86xf32, #tpu.memory_space<smem>>
    %c5 = arith.constant 5 : index
    %5 = memref.load %arg1[%c5] : memref<86xf32, #tpu.memory_space<smem>>
    %c6 = arith.constant 6 : index
    %6 = memref.load %arg1[%c6] : memref<86xf32, #tpu.memory_space<smem>>
    %c7 = arith.constant 7 : index
    %7 = memref.load %arg1[%c7] : memref<86xf32, #tpu.memory_space<smem>>
    %c8 = arith.constant 8 : index
    %8 = memref.load %arg1[%c8] : memref<86xf32, #tpu.memory_space<smem>>
    %c9 = arith.constant 9 : index
    %9 = memref.load %arg1[%c9] : memref<86xf32, #tpu.memory_space<smem>>
    %c10 = arith.constant 10 : index
    %10 = memref.load %arg1[%c10] : memref<86xf32, #tpu.memory_space<smem>>
    %c11 = arith.constant 11 : index
    %11 = memref.load %arg1[%c11] : memref<86xf32, #tpu.memory_space<smem>>
    %c12 = arith.constant 12 : index
    %12 = memref.load %arg1[%c12] : memref<86xf32, #tpu.memory_space<smem>>
    %c13 = arith.constant 13 : index
    %13 = memref.load %arg1[%c13] : memref<86xf32, #tpu.memory_space<smem>>
    %c14 = arith.constant 14 : index
    %14 = memref.load %arg1[%c14] : memref<86xf32, #tpu.memory_space<smem>>
    %c15 = arith.constant 15 : index
    %15 = memref.load %arg1[%c15] : memref<86xf32, #tpu.memory_space<smem>>
    %c16 = arith.constant 16 : index
    %16 = memref.load %arg1[%c16] : memref<86xf32, #tpu.memory_space<smem>>
    %c17 = arith.constant 17 : index
    %17 = memref.load %arg1[%c17] : memref<86xf32, #tpu.memory_space<smem>>
    %c18 = arith.constant 18 : index
    %18 = memref.load %arg1[%c18] : memref<86xf32, #tpu.memory_space<smem>>
    %c19 = arith.constant 19 : index
    %19 = memref.load %arg1[%c19] : memref<86xf32, #tpu.memory_space<smem>>
    %c20 = arith.constant 20 : index
    %20 = memref.load %arg1[%c20] : memref<86xf32, #tpu.memory_space<smem>>
    %c21 = arith.constant 21 : index
    %21 = memref.load %arg1[%c21] : memref<86xf32, #tpu.memory_space<smem>>
    %c22 = arith.constant 22 : index
    %22 = memref.load %arg1[%c22] : memref<86xf32, #tpu.memory_space<smem>>
    %c23 = arith.constant 23 : index
    %23 = memref.load %arg1[%c23] : memref<86xf32, #tpu.memory_space<smem>>
    %c24 = arith.constant 24 : index
    %24 = memref.load %arg1[%c24] : memref<86xf32, #tpu.memory_space<smem>>
    %c25 = arith.constant 25 : index
    %25 = memref.load %arg1[%c25] : memref<86xf32, #tpu.memory_space<smem>>
    %c26 = arith.constant 26 : index
    %26 = memref.load %arg1[%c26] : memref<86xf32, #tpu.memory_space<smem>>
    %c27 = arith.constant 27 : index
    %27 = memref.load %arg1[%c27] : memref<86xf32, #tpu.memory_space<smem>>
    %c28 = arith.constant 28 : index
    %28 = memref.load %arg1[%c28] : memref<86xf32, #tpu.memory_space<smem>>
    %c29 = arith.constant 29 : index
    %29 = memref.load %arg1[%c29] : memref<86xf32, #tpu.memory_space<smem>>
    %c30 = arith.constant 30 : index
    %30 = memref.load %arg1[%c30] : memref<86xf32, #tpu.memory_space<smem>>
    %c31 = arith.constant 31 : index
    %31 = memref.load %arg1[%c31] : memref<86xf32, #tpu.memory_space<smem>>
    %c32 = arith.constant 32 : index
    %32 = memref.load %arg1[%c32] : memref<86xf32, #tpu.memory_space<smem>>
    %c33 = arith.constant 33 : index
    %33 = memref.load %arg1[%c33] : memref<86xf32, #tpu.memory_space<smem>>
    %c34 = arith.constant 34 : index
    %34 = memref.load %arg1[%c34] : memref<86xf32, #tpu.memory_space<smem>>
    %c35 = arith.constant 35 : index
    %35 = memref.load %arg1[%c35] : memref<86xf32, #tpu.memory_space<smem>>
    %c36 = arith.constant 36 : index
    %36 = memref.load %arg1[%c36] : memref<86xf32, #tpu.memory_space<smem>>
    %c37 = arith.constant 37 : index
    %37 = memref.load %arg1[%c37] : memref<86xf32, #tpu.memory_space<smem>>
    %c38 = arith.constant 38 : index
    %38 = memref.load %arg1[%c38] : memref<86xf32, #tpu.memory_space<smem>>
    %c39 = arith.constant 39 : index
    %39 = memref.load %arg1[%c39] : memref<86xf32, #tpu.memory_space<smem>>
    %c40 = arith.constant 40 : index
    %40 = memref.load %arg1[%c40] : memref<86xf32, #tpu.memory_space<smem>>
    %c41 = arith.constant 41 : index
    %41 = memref.load %arg1[%c41] : memref<86xf32, #tpu.memory_space<smem>>
    %c42 = arith.constant 42 : index
    %42 = memref.load %arg1[%c42] : memref<86xf32, #tpu.memory_space<smem>>
    %c43 = arith.constant 43 : index
    %43 = memref.load %arg1[%c43] : memref<86xf32, #tpu.memory_space<smem>>
    %c44 = arith.constant 44 : index
    %44 = memref.load %arg1[%c44] : memref<86xf32, #tpu.memory_space<smem>>
    %c45 = arith.constant 45 : index
    %45 = memref.load %arg1[%c45] : memref<86xf32, #tpu.memory_space<smem>>
    %c46 = arith.constant 46 : index
    %46 = memref.load %arg1[%c46] : memref<86xf32, #tpu.memory_space<smem>>
    %c47 = arith.constant 47 : index
    %47 = memref.load %arg1[%c47] : memref<86xf32, #tpu.memory_space<smem>>
    %c48 = arith.constant 48 : index
    %48 = memref.load %arg1[%c48] : memref<86xf32, #tpu.memory_space<smem>>
    %c49 = arith.constant 49 : index
    %49 = memref.load %arg1[%c49] : memref<86xf32, #tpu.memory_space<smem>>
    %c50 = arith.constant 50 : index
    %50 = memref.load %arg1[%c50] : memref<86xf32, #tpu.memory_space<smem>>
    %c51 = arith.constant 51 : index
    %51 = memref.load %arg1[%c51] : memref<86xf32, #tpu.memory_space<smem>>
    %c52 = arith.constant 52 : index
    %52 = memref.load %arg1[%c52] : memref<86xf32, #tpu.memory_space<smem>>
    %c53 = arith.constant 53 : index
    %53 = memref.load %arg1[%c53] : memref<86xf32, #tpu.memory_space<smem>>
    %c54 = arith.constant 54 : index
    %54 = memref.load %arg1[%c54] : memref<86xf32, #tpu.memory_space<smem>>
    %c55 = arith.constant 55 : index
    %55 = memref.load %arg1[%c55] : memref<86xf32, #tpu.memory_space<smem>>
    %c56 = arith.constant 56 : index
    %56 = memref.load %arg1[%c56] : memref<86xf32, #tpu.memory_space<smem>>
    %c57 = arith.constant 57 : index
    %57 = memref.load %arg1[%c57] : memref<86xf32, #tpu.memory_space<smem>>
    %c58 = arith.constant 58 : index
    %58 = memref.load %arg1[%c58] : memref<86xf32, #tpu.memory_space<smem>>
    %c59 = arith.constant 59 : index
    %59 = memref.load %arg1[%c59] : memref<86xf32, #tpu.memory_space<smem>>
    %c60 = arith.constant 60 : index
    %60 = memref.load %arg1[%c60] : memref<86xf32, #tpu.memory_space<smem>>
    %c61 = arith.constant 61 : index
    %61 = memref.load %arg1[%c61] : memref<86xf32, #tpu.memory_space<smem>>
    %c62 = arith.constant 62 : index
    %62 = memref.load %arg1[%c62] : memref<86xf32, #tpu.memory_space<smem>>
    %c63 = arith.constant 63 : index
    %63 = memref.load %arg1[%c63] : memref<86xf32, #tpu.memory_space<smem>>
    %c64 = arith.constant 64 : index
    %64 = memref.load %arg1[%c64] : memref<86xf32, #tpu.memory_space<smem>>
    %c65 = arith.constant 65 : index
    %65 = memref.load %arg1[%c65] : memref<86xf32, #tpu.memory_space<smem>>
    %c66 = arith.constant 66 : index
    %66 = memref.load %arg1[%c66] : memref<86xf32, #tpu.memory_space<smem>>
    %c67 = arith.constant 67 : index
    %67 = memref.load %arg1[%c67] : memref<86xf32, #tpu.memory_space<smem>>
    %c68 = arith.constant 68 : index
    %68 = memref.load %arg1[%c68] : memref<86xf32, #tpu.memory_space<smem>>
    %c69 = arith.constant 69 : index
    %69 = memref.load %arg1[%c69] : memref<86xf32, #tpu.memory_space<smem>>
    %c70 = arith.constant 70 : index
    %70 = memref.load %arg1[%c70] : memref<86xf32, #tpu.memory_space<smem>>
    %c71 = arith.constant 71 : index
    %71 = memref.load %arg1[%c71] : memref<86xf32, #tpu.memory_space<smem>>
    %c72 = arith.constant 72 : index
    %72 = memref.load %arg1[%c72] : memref<86xf32, #tpu.memory_space<smem>>
    %c73 = arith.constant 73 : index
    %73 = memref.load %arg1[%c73] : memref<86xf32, #tpu.memory_space<smem>>
    %c74 = arith.constant 74 : index
    %74 = memref.load %arg1[%c74] : memref<86xf32, #tpu.memory_space<smem>>
    %c75 = arith.constant 75 : index
    %75 = memref.load %arg1[%c75] : memref<86xf32, #tpu.memory_space<smem>>
    %c76 = arith.constant 76 : index
    %76 = memref.load %arg1[%c76] : memref<86xf32, #tpu.memory_space<smem>>
    %c77 = arith.constant 77 : index
    %77 = memref.load %arg1[%c77] : memref<86xf32, #tpu.memory_space<smem>>
    %c78 = arith.constant 78 : index
    %78 = memref.load %arg1[%c78] : memref<86xf32, #tpu.memory_space<smem>>
    %c79 = arith.constant 79 : index
    %79 = memref.load %arg1[%c79] : memref<86xf32, #tpu.memory_space<smem>>
    %c80 = arith.constant 80 : index
    %80 = memref.load %arg1[%c80] : memref<86xf32, #tpu.memory_space<smem>>
    %c81 = arith.constant 81 : index
    %81 = memref.load %arg1[%c81] : memref<86xf32, #tpu.memory_space<smem>>
    %c82 = arith.constant 82 : index
    %82 = memref.load %arg1[%c82] : memref<86xf32, #tpu.memory_space<smem>>
    %c83 = arith.constant 83 : index
    %83 = memref.load %arg1[%c83] : memref<86xf32, #tpu.memory_space<smem>>
    %c84 = arith.constant 84 : index
    %84 = memref.load %arg1[%c84] : memref<86xf32, #tpu.memory_space<smem>>
    %c85 = arith.constant 85 : index
    %85 = memref.load %arg1[%c85] : memref<86xf32, #tpu.memory_space<smem>>
    %c0_i32 = arith.constant 0 : i32
    %c16_i32 = arith.constant 16 : i32
    %86 = arith.muli %c0_i32, %c16_i32 : i32
    %87 = tpu.assume_multiple %86, 16 : i32
    %c0_0 = arith.constant 0 : index
    %88 = arith.index_cast %87 : i32 to index
    %c0_1 = arith.constant 0 : index
    %89 = vector.load %arg2[%c0_0, %88, %c0_1] : memref<4x16x128xf32, #tpu.memory_space<vmem>>, vector<1x16x128xf32>
    %90 = vector.shape_cast %89 : vector<1x16x128xf32> to vector<16x128xf32>
    %c1_2 = arith.constant 1 : index
    %91 = arith.index_cast %87 : i32 to index
    %c0_3 = arith.constant 0 : index
    %92 = vector.load %arg2[%c1_2, %91, %c0_3] : memref<4x16x128xf32, #tpu.memory_space<vmem>>, vector<1x16x128xf32>
    %93 = vector.shape_cast %92 : vector<1x16x128xf32> to vector<16x128xf32>
    %c2_4 = arith.constant 2 : index
    %94 = arith.index_cast %87 : i32 to index
    %c0_5 = arith.constant 0 : index
    %95 = vector.load %arg2[%c2_4, %94, %c0_5] : memref<4x16x128xf32, #tpu.memory_space<vmem>>, vector<1x16x128xf32>
    %96 = vector.shape_cast %95 : vector<1x16x128xf32> to vector<16x128xf32>
    %c3_6 = arith.constant 3 : index
    %97 = arith.index_cast %87 : i32 to index
    %c0_7 = arith.constant 0 : index
    %98 = vector.load %arg2[%c3_6, %97, %c0_7] : memref<4x16x128xf32, #tpu.memory_space<vmem>>, vector<1x16x128xf32>
    %99 = vector.shape_cast %98 : vector<1x16x128xf32> to vector<16x128xf32>
    %100 = vector.broadcast %0 : f32 to vector<16x128xf32>
    %101 = arith.mulf %90, %100 : vector<16x128xf32>
    %102 = vector.broadcast %1 : f32 to vector<16x128xf32>
    %103 = arith.mulf %93, %102 : vector<16x128xf32>
    %104 = arith.addf %101, %103 : vector<16x128xf32>
    %105 = vector.broadcast %2 : f32 to vector<16x128xf32>
    %106 = arith.mulf %96, %105 : vector<16x128xf32>
    %107 = arith.addf %104, %106 : vector<16x128xf32>
    %108 = vector.broadcast %3 : f32 to vector<16x128xf32>
    %109 = arith.mulf %99, %108 : vector<16x128xf32>
    %110 = arith.addf %107, %109 : vector<16x128xf32>
    %111 = vector.broadcast %24 : f32 to vector<16x128xf32>
    %112 = arith.addf %110, %111 : vector<16x128xf32>
    %cst = arith.constant 0.000000e+00 : f32
    %113 = vector.broadcast %cst : f32 to vector<16x128xf32>
    %114 = arith.maximumf %112, %113 : vector<16x128xf32>
    %115 = vector.broadcast %4 : f32 to vector<16x128xf32>
    %116 = arith.mulf %90, %115 : vector<16x128xf32>
    %117 = vector.broadcast %5 : f32 to vector<16x128xf32>
    %118 = arith.mulf %93, %117 : vector<16x128xf32>
    %119 = arith.addf %116, %118 : vector<16x128xf32>
    %120 = vector.broadcast %6 : f32 to vector<16x128xf32>
    %121 = arith.mulf %96, %120 : vector<16x128xf32>
    %122 = arith.addf %119, %121 : vector<16x128xf32>
    %123 = vector.broadcast %7 : f32 to vector<16x128xf32>
    %124 = arith.mulf %99, %123 : vector<16x128xf32>
    %125 = arith.addf %122, %124 : vector<16x128xf32>
    %126 = vector.broadcast %25 : f32 to vector<16x128xf32>
    %127 = arith.addf %125, %126 : vector<16x128xf32>
    %cst_8 = arith.constant 0.000000e+00 : f32
    %128 = vector.broadcast %cst_8 : f32 to vector<16x128xf32>
    %129 = arith.maximumf %127, %128 : vector<16x128xf32>
    %130 = vector.broadcast %8 : f32 to vector<16x128xf32>
    %131 = arith.mulf %90, %130 : vector<16x128xf32>
    %132 = vector.broadcast %9 : f32 to vector<16x128xf32>
    %133 = arith.mulf %93, %132 : vector<16x128xf32>
    %134 = arith.addf %131, %133 : vector<16x128xf32>
    %135 = vector.broadcast %10 : f32 to vector<16x128xf32>
    %136 = arith.mulf %96, %135 : vector<16x128xf32>
    %137 = arith.addf %134, %136 : vector<16x128xf32>
    %138 = vector.broadcast %11 : f32 to vector<16x128xf32>
    %139 = arith.mulf %99, %138 : vector<16x128xf32>
    %140 = arith.addf %137, %139 : vector<16x128xf32>
    %141 = vector.broadcast %26 : f32 to vector<16x128xf32>
    %142 = arith.addf %140, %141 : vector<16x128xf32>
    %cst_9 = arith.constant 0.000000e+00 : f32
    %143 = vector.broadcast %cst_9 : f32 to vector<16x128xf32>
    %144 = arith.maximumf %142, %143 : vector<16x128xf32>
    %145 = vector.broadcast %12 : f32 to vector<16x128xf32>
    %146 = arith.mulf %90, %145 : vector<16x128xf32>
    %147 = vector.broadcast %13 : f32 to vector<16x128xf32>
    %148 = arith.mulf %93, %147 : vector<16x128xf32>
    %149 = arith.addf %146, %148 : vector<16x128xf32>
    %150 = vector.broadcast %14 : f32 to vector<16x128xf32>
    %151 = arith.mulf %96, %150 : vector<16x128xf32>
    %152 = arith.addf %149, %151 : vector<16x128xf32>
    %153 = vector.broadcast %15 : f32 to vector<16x128xf32>
    %154 = arith.mulf %99, %153 : vector<16x128xf32>
    %155 = arith.addf %152, %154 : vector<16x128xf32>
    %156 = vector.broadcast %27 : f32 to vector<16x128xf32>
    %157 = arith.addf %155, %156 : vector<16x128xf32>
    %cst_10 = arith.constant 0.000000e+00 : f32
    %158 = vector.broadcast %cst_10 : f32 to vector<16x128xf32>
    %159 = arith.maximumf %157, %158 : vector<16x128xf32>
    %160 = vector.broadcast %16 : f32 to vector<16x128xf32>
    %161 = arith.mulf %90, %160 : vector<16x128xf32>
    %162 = vector.broadcast %17 : f32 to vector<16x128xf32>
    %163 = arith.mulf %93, %162 : vector<16x128xf32>
    %164 = arith.addf %161, %163 : vector<16x128xf32>
    %165 = vector.broadcast %18 : f32 to vector<16x128xf32>
    %166 = arith.mulf %96, %165 : vector<16x128xf32>
    %167 = arith.addf %164, %166 : vector<16x128xf32>
    %168 = vector.broadcast %19 : f32 to vector<16x128xf32>
    %169 = arith.mulf %99, %168 : vector<16x128xf32>
    %170 = arith.addf %167, %169 : vector<16x128xf32>
    %171 = vector.broadcast %28 : f32 to vector<16x128xf32>
    %172 = arith.addf %170, %171 : vector<16x128xf32>
    %cst_11 = arith.constant 0.000000e+00 : f32
    %173 = vector.broadcast %cst_11 : f32 to vector<16x128xf32>
    %174 = arith.maximumf %172, %173 : vector<16x128xf32>
    %175 = vector.broadcast %20 : f32 to vector<16x128xf32>
    %176 = arith.mulf %90, %175 : vector<16x128xf32>
    %177 = vector.broadcast %21 : f32 to vector<16x128xf32>
    %178 = arith.mulf %93, %177 : vector<16x128xf32>
    %179 = arith.addf %176, %178 : vector<16x128xf32>
    %180 = vector.broadcast %22 : f32 to vector<16x128xf32>
    %181 = arith.mulf %96, %180 : vector<16x128xf32>
    %182 = arith.addf %179, %181 : vector<16x128xf32>
    %183 = vector.broadcast %23 : f32 to vector<16x128xf32>
    %184 = arith.mulf %99, %183 : vector<16x128xf32>
    %185 = arith.addf %182, %184 : vector<16x128xf32>
    %186 = vector.broadcast %29 : f32 to vector<16x128xf32>
    %187 = arith.addf %185, %186 : vector<16x128xf32>
    %cst_12 = arith.constant 0.000000e+00 : f32
    %188 = vector.broadcast %cst_12 : f32 to vector<16x128xf32>
    %189 = arith.maximumf %187, %188 : vector<16x128xf32>
    %190 = vector.broadcast %30 : f32 to vector<16x128xf32>
    %191 = arith.mulf %114, %190 : vector<16x128xf32>
    %192 = vector.broadcast %31 : f32 to vector<16x128xf32>
    %193 = arith.mulf %129, %192 : vector<16x128xf32>
    %194 = arith.addf %191, %193 : vector<16x128xf32>
    %195 = vector.broadcast %32 : f32 to vector<16x128xf32>
    %196 = arith.mulf %144, %195 : vector<16x128xf32>
    %197 = arith.addf %194, %196 : vector<16x128xf32>
    %198 = vector.broadcast %33 : f32 to vector<16x128xf32>
    %199 = arith.mulf %159, %198 : vector<16x128xf32>
    %200 = arith.addf %197, %199 : vector<16x128xf32>
    %201 = vector.broadcast %34 : f32 to vector<16x128xf32>
    %202 = arith.mulf %174, %201 : vector<16x128xf32>
    %203 = arith.addf %200, %202 : vector<16x128xf32>
    %204 = vector.broadcast %35 : f32 to vector<16x128xf32>
    %205 = arith.mulf %189, %204 : vector<16x128xf32>
    %206 = arith.addf %203, %205 : vector<16x128xf32>
    %207 = vector.broadcast %66 : f32 to vector<16x128xf32>
    %208 = arith.addf %206, %207 : vector<16x128xf32>
    %cst_13 = arith.constant 0.000000e+00 : f32
    %209 = vector.broadcast %cst_13 : f32 to vector<16x128xf32>
    %210 = arith.maximumf %208, %209 : vector<16x128xf32>
    %211 = vector.broadcast %36 : f32 to vector<16x128xf32>
    %212 = arith.mulf %114, %211 : vector<16x128xf32>
    %213 = vector.broadcast %37 : f32 to vector<16x128xf32>
    %214 = arith.mulf %129, %213 : vector<16x128xf32>
    %215 = arith.addf %212, %214 : vector<16x128xf32>
    %216 = vector.broadcast %38 : f32 to vector<16x128xf32>
    %217 = arith.mulf %144, %216 : vector<16x128xf32>
    %218 = arith.addf %215, %217 : vector<16x128xf32>
    %219 = vector.broadcast %39 : f32 to vector<16x128xf32>
    %220 = arith.mulf %159, %219 : vector<16x128xf32>
    %221 = arith.addf %218, %220 : vector<16x128xf32>
    %222 = vector.broadcast %40 : f32 to vector<16x128xf32>
    %223 = arith.mulf %174, %222 : vector<16x128xf32>
    %224 = arith.addf %221, %223 : vector<16x128xf32>
    %225 = vector.broadcast %41 : f32 to vector<16x128xf32>
    %226 = arith.mulf %189, %225 : vector<16x128xf32>
    %227 = arith.addf %224, %226 : vector<16x128xf32>
    %228 = vector.broadcast %67 : f32 to vector<16x128xf32>
    %229 = arith.addf %227, %228 : vector<16x128xf32>
    %cst_14 = arith.constant 0.000000e+00 : f32
    %230 = vector.broadcast %cst_14 : f32 to vector<16x128xf32>
    %231 = arith.maximumf %229, %230 : vector<16x128xf32>
    %232 = vector.broadcast %42 : f32 to vector<16x128xf32>
    %233 = arith.mulf %114, %232 : vector<16x128xf32>
    %234 = vector.broadcast %43 : f32 to vector<16x128xf32>
    %235 = arith.mulf %129, %234 : vector<16x128xf32>
    %236 = arith.addf %233, %235 : vector<16x128xf32>
    %237 = vector.broadcast %44 : f32 to vector<16x128xf32>
    %238 = arith.mulf %144, %237 : vector<16x128xf32>
    %239 = arith.addf %236, %238 : vector<16x128xf32>
    %240 = vector.broadcast %45 : f32 to vector<16x128xf32>
    %241 = arith.mulf %159, %240 : vector<16x128xf32>
    %242 = arith.addf %239, %241 : vector<16x128xf32>
    %243 = vector.broadcast %46 : f32 to vector<16x128xf32>
    %244 = arith.mulf %174, %243 : vector<16x128xf32>
    %245 = arith.addf %242, %244 : vector<16x128xf32>
    %246 = vector.broadcast %47 : f32 to vector<16x128xf32>
    %247 = arith.mulf %189, %246 : vector<16x128xf32>
    %248 = arith.addf %245, %247 : vector<16x128xf32>
    %249 = vector.broadcast %68 : f32 to vector<16x128xf32>
    %250 = arith.addf %248, %249 : vector<16x128xf32>
    %cst_15 = arith.constant 0.000000e+00 : f32
    %251 = vector.broadcast %cst_15 : f32 to vector<16x128xf32>
    %252 = arith.maximumf %250, %251 : vector<16x128xf32>
    %253 = vector.broadcast %48 : f32 to vector<16x128xf32>
    %254 = arith.mulf %114, %253 : vector<16x128xf32>
    %255 = vector.broadcast %49 : f32 to vector<16x128xf32>
    %256 = arith.mulf %129, %255 : vector<16x128xf32>
    %257 = arith.addf %254, %256 : vector<16x128xf32>
    %258 = vector.broadcast %50 : f32 to vector<16x128xf32>
    %259 = arith.mulf %144, %258 : vector<16x128xf32>
    %260 = arith.addf %257, %259 : vector<16x128xf32>
    %261 = vector.broadcast %51 : f32 to vector<16x128xf32>
    %262 = arith.mulf %159, %261 : vector<16x128xf32>
    %263 = arith.addf %260, %262 : vector<16x128xf32>
    %264 = vector.broadcast %52 : f32 to vector<16x128xf32>
    %265 = arith.mulf %174, %264 : vector<16x128xf32>
    %266 = arith.addf %263, %265 : vector<16x128xf32>
    %267 = vector.broadcast %53 : f32 to vector<16x128xf32>
    %268 = arith.mulf %189, %267 : vector<16x128xf32>
    %269 = arith.addf %266, %268 : vector<16x128xf32>
    %270 = vector.broadcast %69 : f32 to vector<16x128xf32>
    %271 = arith.addf %269, %270 : vector<16x128xf32>
    %cst_16 = arith.constant 0.000000e+00 : f32
    %272 = vector.broadcast %cst_16 : f32 to vector<16x128xf32>
    %273 = arith.maximumf %271, %272 : vector<16x128xf32>
    %274 = vector.broadcast %54 : f32 to vector<16x128xf32>
    %275 = arith.mulf %114, %274 : vector<16x128xf32>
    %276 = vector.broadcast %55 : f32 to vector<16x128xf32>
    %277 = arith.mulf %129, %276 : vector<16x128xf32>
    %278 = arith.addf %275, %277 : vector<16x128xf32>
    %279 = vector.broadcast %56 : f32 to vector<16x128xf32>
    %280 = arith.mulf %144, %279 : vector<16x128xf32>
    %281 = arith.addf %278, %280 : vector<16x128xf32>
    %282 = vector.broadcast %57 : f32 to vector<16x128xf32>
    %283 = arith.mulf %159, %282 : vector<16x128xf32>
    %284 = arith.addf %281, %283 : vector<16x128xf32>
    %285 = vector.broadcast %58 : f32 to vector<16x128xf32>
    %286 = arith.mulf %174, %285 : vector<16x128xf32>
    %287 = arith.addf %284, %286 : vector<16x128xf32>
    %288 = vector.broadcast %59 : f32 to vector<16x128xf32>
    %289 = arith.mulf %189, %288 : vector<16x128xf32>
    %290 = arith.addf %287, %289 : vector<16x128xf32>
    %291 = vector.broadcast %70 : f32 to vector<16x128xf32>
    %292 = arith.addf %290, %291 : vector<16x128xf32>
    %cst_17 = arith.constant 0.000000e+00 : f32
    %293 = vector.broadcast %cst_17 : f32 to vector<16x128xf32>
    %294 = arith.maximumf %292, %293 : vector<16x128xf32>
    %295 = vector.broadcast %60 : f32 to vector<16x128xf32>
    %296 = arith.mulf %114, %295 : vector<16x128xf32>
    %297 = vector.broadcast %61 : f32 to vector<16x128xf32>
    %298 = arith.mulf %129, %297 : vector<16x128xf32>
    %299 = arith.addf %296, %298 : vector<16x128xf32>
    %300 = vector.broadcast %62 : f32 to vector<16x128xf32>
    %301 = arith.mulf %144, %300 : vector<16x128xf32>
    %302 = arith.addf %299, %301 : vector<16x128xf32>
    %303 = vector.broadcast %63 : f32 to vector<16x128xf32>
    %304 = arith.mulf %159, %303 : vector<16x128xf32>
    %305 = arith.addf %302, %304 : vector<16x128xf32>
    %306 = vector.broadcast %64 : f32 to vector<16x128xf32>
    %307 = arith.mulf %174, %306 : vector<16x128xf32>
    %308 = arith.addf %305, %307 : vector<16x128xf32>
    %309 = vector.broadcast %65 : f32 to vector<16x128xf32>
    %310 = arith.mulf %189, %309 : vector<16x128xf32>
    %311 = arith.addf %308, %310 : vector<16x128xf32>
    %312 = vector.broadcast %71 : f32 to vector<16x128xf32>
    %313 = arith.addf %311, %312 : vector<16x128xf32>
    %cst_18 = arith.constant 0.000000e+00 : f32
    %314 = vector.broadcast %cst_18 : f32 to vector<16x128xf32>
    %315 = arith.maximumf %313, %314 : vector<16x128xf32>
    %316 = vector.broadcast %72 : f32 to vector<16x128xf32>
    %317 = arith.mulf %210, %316 : vector<16x128xf32>
    %318 = vector.broadcast %73 : f32 to vector<16x128xf32>
    %319 = arith.mulf %231, %318 : vector<16x128xf32>
    %320 = arith.addf %317, %319 : vector<16x128xf32>
    %321 = vector.broadcast %74 : f32 to vector<16x128xf32>
    %322 = arith.mulf %252, %321 : vector<16x128xf32>
    %323 = arith.addf %320, %322 : vector<16x128xf32>
    %324 = vector.broadcast %75 : f32 to vector<16x128xf32>
    %325 = arith.mulf %273, %324 : vector<16x128xf32>
    %326 = arith.addf %323, %325 : vector<16x128xf32>
    %327 = vector.broadcast %76 : f32 to vector<16x128xf32>
    %328 = arith.mulf %294, %327 : vector<16x128xf32>
    %329 = arith.addf %326, %328 : vector<16x128xf32>
    %330 = vector.broadcast %77 : f32 to vector<16x128xf32>
    %331 = arith.mulf %315, %330 : vector<16x128xf32>
    %332 = arith.addf %329, %331 : vector<16x128xf32>
    %333 = vector.broadcast %84 : f32 to vector<16x128xf32>
    %334 = arith.addf %332, %333 : vector<16x128xf32>
    %335 = vector.broadcast %78 : f32 to vector<16x128xf32>
    %336 = arith.mulf %210, %335 : vector<16x128xf32>
    %337 = vector.broadcast %79 : f32 to vector<16x128xf32>
    %338 = arith.mulf %231, %337 : vector<16x128xf32>
    %339 = arith.addf %336, %338 : vector<16x128xf32>
    %340 = vector.broadcast %80 : f32 to vector<16x128xf32>
    %341 = arith.mulf %252, %340 : vector<16x128xf32>
    %342 = arith.addf %339, %341 : vector<16x128xf32>
    %343 = vector.broadcast %81 : f32 to vector<16x128xf32>
    %344 = arith.mulf %273, %343 : vector<16x128xf32>
    %345 = arith.addf %342, %344 : vector<16x128xf32>
    %346 = vector.broadcast %82 : f32 to vector<16x128xf32>
    %347 = arith.mulf %294, %346 : vector<16x128xf32>
    %348 = arith.addf %345, %347 : vector<16x128xf32>
    %349 = vector.broadcast %83 : f32 to vector<16x128xf32>
    %350 = arith.mulf %315, %349 : vector<16x128xf32>
    %351 = arith.addf %348, %350 : vector<16x128xf32>
    %352 = vector.broadcast %85 : f32 to vector<16x128xf32>
    %353 = arith.addf %351, %352 : vector<16x128xf32>
    %c0_19 = arith.constant 0 : index
    %354 = arith.index_cast %87 : i32 to index
    %c0_20 = arith.constant 0 : index
    %355 = vector.load %arg3[%c0_19, %354, %c0_20] : memref<2x16x128xf32, #tpu.memory_space<vmem>>, vector<1x16x128xf32>
    %356 = vector.shape_cast %355 : vector<1x16x128xf32> to vector<16x128xf32>
    %357 = vector.shape_cast %334 : vector<16x128xf32> to vector<1x16x128xf32>
    tpu.vector_store %arg3[%c0_19, %354, %c0_20], %357 {strides = array<i32>} : memref<2x16x128xf32, #tpu.memory_space<vmem>>, vector<1x16x128xf32>,
    %c1_21 = arith.constant 1 : index
    %358 = arith.index_cast %87 : i32 to index
    %c0_22 = arith.constant 0 : index
    %359 = vector.load %arg3[%c1_21, %358, %c0_22] : memref<2x16x128xf32, #tpu.memory_space<vmem>>, vector<1x16x128xf32>
    %360 = vector.shape_cast %359 : vector<1x16x128xf32> to vector<16x128xf32>
    %361 = vector.shape_cast %353 : vector<16x128xf32> to vector<1x16x128xf32>
    tpu.vector_store %arg3[%c1_21, %358, %c0_22], %361 {strides = array<i32>} : memref<2x16x128xf32, #tpu.memory_space<vmem>>, vector<1x16x128xf32>,
    %c1_i32 = arith.constant 1 : i32
    return
  }
  func.func @transform_0(%arg0: i32) -> i32 {
    %c0_i32 = arith.constant 0 : i32
    %c0_i32_0 = arith.constant 0 : i32
    return %c0_i32 : i32
  }
  func.func @transform_1(%arg0: i32) -> (i32, i32, i32) {
    %c0_i32 = arith.constant 0 : i32
    %c0_i32_0 = arith.constant 0 : i32
    %c0_i32_1 = arith.constant 0 : i32
    return %c0_i32, %arg0, %c0_i32_0 : i32, i32, i32
  }
  func.func @transform_2(%arg0: i32) -> (i32, i32, i32) {
    %c0_i32 = arith.constant 0 : i32
    %c0_i32_0 = arith.constant 0 : i32
    %c0_i32_1 = arith.constant 0 : i32
    return %c0_i32, %arg0, %c0_i32_0 : i32, i32, i32
  }
}

</mosaic_0001>

<llo_original>
// kernel: dqn_forward.1
$region0: #{dqn_forward.1}
  #allocation0 [shape = 'u32[]', space=smem, size = 0x4, offset = 0x4, fixed_abs, tag = 'smem constant byte address 0x4 - core index']
  #allocation1 [shape = 'u32[144,128]{1,0:T(1,128)}', space=vmem, size = 0x12000, scoped, tag = 'internal scratch']
  %s0 = inlined_call_operand.vmem [shape: f32[86], index: 0, kind: input, shape index: {}]
  %s1 = inlined_call_operand.vmem [shape: f32[4,16,128], index: 1, kind: input, shape index: {}]
  %s2 = inlined_call_operand.vmem [shape: f32[2,16,128], index: 2, kind: output, shape index: {}]
  %s3 = sld [smem:[#allocation0]]
  $region22: #{dqn_forward.1} parent=0
    _
  %s5 = ssub.s32 1, %s3
  %s6 = scalar_select 0, %s5, %s3
  $region1: #{dqn_forward.1} parent=0
    #allocation2 [shape = 'u8[512]{0}', space=smem, size = 0x200, scoped, tag = 'input window, operand 0, single buffered']
    #allocation3 [shape = 's32[1]{0}', space=sflag, size = 0x4, scoped, tag = 'scoped memory for dqn_forward.1']
    %7 = vsyncpa [#allocation3], 0
    // Predicated region
    $region2: #{dqn_forward.1} parent=1 // pred_check
      _
    $region3: #{dqn_forward.1} parent=1 // pred_check_branch
      %9 = sbr.rel (0) target = $region5
    $region4: #{dqn_forward.1} parent=1 // pred_region
      %s11 = ssub.s32 16, 16
      %12 = vsyncadd [#allocation3], %s11
      %s14 = sshll.u32 %s0, 4
      %s15 = int_to_ptr.vmem [resolvable:$true] %s14
      %17 = dma.vmem_to_smem %s15, 16, [#allocation2], [#allocation3]
    $region5: #{dqn_forward.1} parent=1 // pred_fallthru
      _
    // Predicated region
    $region6: #{dqn_forward.1} parent=1 // pred_check
      _
    $region7: #{dqn_forward.1} parent=1 // pred_check_branch
      %19 = sbr.rel (0) target = $region9
    $region8: #{dqn_forward.1} parent=1 // pred_region
      _
    $region9: #{dqn_forward.1} parent=1 // pred_fallthru
      _
    // Predicated region
    $region10: #{dqn_forward.1} parent=1 // pred_check
      _
    $region11: #{dqn_forward.1} parent=1 // pred_check_branch
      %21 = sbr.rel (0) target = $region13
    $region12: #{dqn_forward.1} parent=1 // pred_region
      %22 = dma.done [#allocation3], 16
    $region13: #{dqn_forward.1} parent=1 // pred_fallthru
      _
    %23 = sfence
    %s24 = sld [smem:[#allocation2]]
    %s25 = sld [smem:[#allocation2 + $0x1]]
    %s26 = sld [smem:[#allocation2 + $0x2]]
    %s27 = sld [smem:[#allocation2 + $0x3]]
    %s28 = sld [smem:[#allocation2 + $0x4]]
    %s29 = sld [smem:[#allocation2 + $0x5]]
    %s30 = sld [smem:[#allocation2 + $0x6]]
    %s31 = sld [smem:[#allocation2 + $0x7]]
    %s32 = sld [smem:[#allocation2 + $0x8]]
    %s33 = sld [smem:[#allocation2 + $0x9]]
    %s34 = sld [smem:[#allocation2 + $0xa]]
    %s35 = sld [smem:[#allocation2 + $0xb]]
    %s36 = sld [smem:[#allocation2 + $0xc]]
    %s37 = sld [smem:[#allocation2 + $0xd]]
    %s38 = sld [smem:[#allocation2 + $0xe]]
    %s39 = sld [smem:[#allocation2 + $0xf]]
    %s40 = sld [smem:[#allocation2 + $0x10]]
    %s41 = sld [smem:[#allocation2 + $0x11]]
    %s42 = sld [smem:[#allocation2 + $0x12]]
    %s43 = sld [smem:[#allocation2 + $0x13]]
    %s44 = sld [smem:[#allocation2 + $0x14]]
    %s45 = sld [smem:[#allocation2 + $0x15]]
    %s46 = sld [smem:[#allocation2 + $0x16]]
    %s47 = sld [smem:[#allocation2 + $0x17]]
    %s48 = sld [smem:[#allocation2 + $0x18]]
    %s49 = sld [smem:[#allocation2 + $0x19]]
    %s50 = sld [smem:[#allocation2 + $0x1a]]
    %s51 = sld [smem:[#allocation2 + $0x1b]]
    %s52 = sld [smem:[#allocation2 + $0x1c]]
    %s53 = sld [smem:[#allocation2 + $0x1d]]
    %s54 = sld [smem:[#allocation2 + $0x1e]]
    %s55 = sld [smem:[#allocation2 + $0x1f]]
    %s56 = sld [smem:[#allocation2 + $0x20]]
    %s57 = sld [smem:[#allocation2 + $0x21]]
    %s58 = sld [smem:[#allocation2 + $0x22]]
    %s59 = sld [smem:[#allocation2 + $0x23]]
    %s60 = sld [smem:[#allocation2 + $0x24]]
    %s61 = sld [smem:[#allocation2 + $0x25]]
    %s62 = sld [smem:[#allocation2 + $0x26]]
    %s63 = sld [smem:[#allocation2 + $0x27]]
    %s64 = sld [smem:[#allocation2 + $0x28]]
    %s65 = sld [smem:[#allocation2 + $0x29]]
    %s66 = sld [smem:[#allocation2 + $0x2a]]
    %s67 = sld [smem:[#allocation2 + $0x2b]]
    %s68 = sld [smem:[#allocation2 + $0x2c]]
    %s69 = sld [smem:[#allocation2 + $0x2d]]
    %s70 = sld [smem:[#allocation2 + $0x2e]]
    %s71 = sld [smem:[#allocation2 + $0x2f]]
    %s72 = sld [smem:[#allocation2 + $0x30]]
    %s73 = sld [smem:[#allocation2 + $0x31]]
    %s74 = sld [smem:[#allocation2 + $0x32]]
    %s75 = sld [smem:[#allocation2 + $0x33]]
    %s76 = sld [smem:[#allocation2 + $0x34]]
    %s77 = sld [smem:[#allocation2 + $0x35]]
    %s78 = sld [smem:[#allocation2 + $0x36]]
    %s79 = sld [smem:[#allocation2 + $0x37]]
    %s80 = sld [smem:[#allocation2 + $0x38]]
    %s81 = sld [smem:[#allocation2 + $0x39]]
    %s82 = sld [smem:[#allocation2 + $0x3a]]
    %s83 = sld [smem:[#allocation2 + $0x3b]]
    %s84 = sld [smem:[#allocation2 + $0x3c]]
    %s85 = sld [smem:[#allocation2 + $0x3d]]
    %s86 = sld [smem:[#allocation2 + $0x3e]]
    %s87 = sld [smem:[#allocation2 + $0x3f]]
    %s88 = sld [smem:[#allocation2 + $0x40]]
    %s89 = sld [smem:[#allocation2 + $0x41]]
    %s90 = sld [smem:[#allocation2 + $0x42]]
    %s91 = sld [smem:[#allocation2 + $0x43]]
    %s92 = sld [smem:[#allocation2 + $0x44]]
    %s93 = sld [smem:[#allocation2 + $0x45]]
    %s94 = sld [smem:[#allocation2 + $0x46]]
    %s95 = sld [smem:[#allocation2 + $0x47]]
    %s96 = sld [smem:[#allocation2 + $0x48]]
    %s97 = sld [smem:[#allocation2 + $0x49]]
    %s98 = sld [smem:[#allocation2 + $0x4a]]
    %s99 = sld [smem:[#allocation2 + $0x4b]]
    %s100 = sld [smem:[#allocation2 + $0x4c]]
    %s101 = sld [smem:[#allocation2 + $0x4d]]
    %s102 = sld [smem:[#allocation2 + $0x4e]]
    %s103 = sld [smem:[#allocation2 + $0x4f]]
    %s104 = sld [smem:[#allocation2 + $0x50]]
    %s105 = sld [smem:[#allocation2 + $0x51]]
    %s106 = sld [smem:[#allocation2 + $0x52]]
    %s107 = sld [smem:[#allocation2 + $0x53]]
    %s108 = sld [smem:[#allocation2 + $0x54]]
    %s109 = sld [smem:[#allocation2 + $0x55]]
    %v110 = vld [vmem:[%s1] sm:$0xff]
    %v111 = vld [vmem:[%s1 + $0x8] sm:$0xff]
    %s112 = sadd.s32 0, 16
    %s113 = scalar_lea.vmem %s1, %s112
    %v114 = vld [vmem:[%s113] sm:$0xff]
    %v115 = vld [vmem:[%s113 + $0x8] sm:$0xff]
    %s116 = sadd.s32 0, 32
    %s117 = scalar_lea.vmem %s1, %s116
    %v118 = vld [vmem:[%s117] sm:$0xff]
    %v119 = vld [vmem:[%s117 + $0x8] sm:$0xff]
    %s120 = sadd.s32 0, 48
    %s121 = scalar_lea.vmem %s1, %s120
    %v122 = vld [vmem:[%s121] sm:$0xff]
    %v123 = vld [vmem:[%s121 + $0x8] sm:$0xff]
    %v124 = vstv %s24
    %v125 = vmul.f32 %v110, %v124
    %v126 = vmul.f32 %v111, %v124
    %v127 = vstv %s25
    %v128 = vmul.f32 %v114, %v127
    %v129 = vmul.f32 %v115, %v127
    %v130 = vadd.f32 %v125, %v128
    %v131 = vadd.f32 %v126, %v129
    %v132 = vstv %s26
    %v133 = vmul.f32 %v118, %v132
    %v134 = vmul.f32 %v119, %v132
    %v135 = vadd.f32 %v130, %v133
    %v136 = vadd.f32 %v131, %v134
    %v137 = vstv %s27
    %v138 = vmul.f32 %v122, %v137
    %v139 = vmul.f32 %v123, %v137
    %v140 = vadd.f32 %v135, %v138
    %v141 = vadd.f32 %v136, %v139
    %v142 = vstv %s48
    %v143 = vadd.f32 %v140, %v142
    %v144 = vadd.f32 %v141, %v142
    %v145 = vmax.f32 %v143, 0.0
    %v146 = vmax.f32 %v144, 0.0
    %v147 = vstv %s28
    %v148 = vmul.f32 %v110, %v147
    %v149 = vmul.f32 %v111, %v147
    %v150 = vstv %s29
    %v151 = vmul.f32 %v114, %v150
    %v152 = vmul.f32 %v115, %v150
    %v153 = vadd.f32 %v148, %v151
    %v154 = vadd.f32 %v149, %v152
    %v155 = vstv %s30
    %v156 = vmul.f32 %v118, %v155
    %v157 = vmul.f32 %v119, %v155
    %v158 = vadd.f32 %v153, %v156
    %v159 = vadd.f32 %v154, %v157
    %v160 = vstv %s31
    %v161 = vmul.f32 %v122, %v160
    %v162 = vmul.f32 %v123, %v160
    %v163 = vadd.f32 %v158, %v161
    %v164 = vadd.f32 %v159, %v162
    %v165 = vstv %s49
    %v166 = vadd.f32 %v163, %v165
    %v167 = vadd.f32 %v164, %v165
    %v168 = vmax.f32 %v166, 0.0
    %v169 = vmax.f32 %v167, 0.0
    %v170 = vstv %s32
    %v171 = vmul.f32 %v110, %v170
    %v172 = vmul.f32 %v111, %v170
    %v173 = vstv %s33
    %v174 = vmul.f32 %v114, %v173
    %v175 = vmul.f32 %v115, %v173
    %v176 = vadd.f32 %v171, %v174
    %v177 = vadd.f32 %v172, %v175
    %v178 = vstv %s34
    %v179 = vmul.f32 %v118, %v178
    %v180 = vmul.f32 %v119, %v178
    %v181 = vadd.f32 %v176, %v179
    %v182 = vadd.f32 %v177, %v180
    %v183 = vstv %s35
    %v184 = vmul.f32 %v122, %v183
    %v185 = vmul.f32 %v123, %v183
    %v186 = vadd.f32 %v181, %v184
    %v187 = vadd.f32 %v182, %v185
    %v188 = vstv %s50
    %v189 = vadd.f32 %v186, %v188
    %v190 = vadd.f32 %v187, %v188
    %v191 = vmax.f32 %v189, 0.0
    %v192 = vmax.f32 %v190, 0.0
    %v193 = vstv %s36
    %v194 = vmul.f32 %v110, %v193
    %v195 = vmul.f32 %v111, %v193
    %v196 = vstv %s37
    %v197 = vmul.f32 %v114, %v196
    %v198 = vmul.f32 %v115, %v196
    %v199 = vadd.f32 %v194, %v197
    %v200 = vadd.f32 %v195, %v198
    %v201 = vstv %s38
    %v202 = vmul.f32 %v118, %v201
    %v203 = vmul.f32 %v119, %v201
    %v204 = vadd.f32 %v199, %v202
    %v205 = vadd.f32 %v200, %v203
    %v206 = vstv %s39
    %v207 = vmul.f32 %v122, %v206
    %v208 = vmul.f32 %v123, %v206
    %v209 = vadd.f32 %v204, %v207
    %v210 = vadd.f32 %v205, %v208
    %v211 = vstv %s51
    %v212 = vadd.f32 %v209, %v211
    %v213 = vadd.f32 %v210, %v211
    %v214 = vmax.f32 %v212, 0.0
    %v215 = vmax.f32 %v213, 0.0
    %v216 = vstv %s40
    %v217 = vmul.f32 %v110, %v216
    %v218 = vmul.f32 %v111, %v216
    %v219 = vstv %s41
    %v220 = vmul.f32 %v114, %v219
    %v221 = vmul.f32 %v115, %v219
    %v222 = vadd.f32 %v217, %v220
    %v223 = vadd.f32 %v218, %v221
    %v224 = vstv %s42
    %v225 = vmul.f32 %v118, %v224
    %v226 = vmul.f32 %v119, %v224
    %v227 = vadd.f32 %v222, %v225
    %v228 = vadd.f32 %v223, %v226
    %v229 = vstv %s43
    %v230 = vmul.f32 %v122, %v229
    %v231 = vmul.f32 %v123, %v229
    %v232 = vadd.f32 %v227, %v230
    %v233 = vadd.f32 %v228, %v231
    %v234 = vstv %s52
    %v235 = vadd.f32 %v232, %v234
    %v236 = vadd.f32 %v233, %v234
    %v237 = vmax.f32 %v235, 0.0
    %v238 = vmax.f32 %v236, 0.0
    %v239 = vstv %s44
    %v240 = vmul.f32 %v110, %v239
    %v241 = vmul.f32 %v111, %v239
    %v242 = vstv %s45
    %v243 = vmul.f32 %v114, %v242
    %v244 = vmul.f32 %v115, %v242
    %v245 = vadd.f32 %v240, %v243
    %v246 = vadd.f32 %v241, %v244
    %v247 = vstv %s46
    %v248 = vmul.f32 %v118, %v247
    %v249 = vmul.f32 %v119, %v247
    %v250 = vadd.f32 %v245, %v248
    %v251 = vadd.f32 %v246, %v249
    %v252 = vstv %s47
    %v253 = vmul.f32 %v122, %v252
    %v254 = vmul.f32 %v123, %v252
    %v255 = vadd.f32 %v250, %v253
    %v256 = vadd.f32 %v251, %v254
    %v257 = vstv %s53
    %v258 = vadd.f32 %v255, %v257
    %v259 = vadd.f32 %v256, %v257
    %v260 = vmax.f32 %v258, 0.0
    %v261 = vmax.f32 %v259, 0.0
    %v262 = vstv %s54
    %v263 = vmul.f32 %v145, %v262
    %v264 = vmul.f32 %v146, %v262
    %v265 = vstv %s55
    %v266 = vmul.f32 %v168, %v265
    %v267 = vmul.f32 %v169, %v265
    %v268 = vadd.f32 %v263, %v266
    %v269 = vadd.f32 %v264, %v267
    %v270 = vstv %s56
    %v271 = vmul.f32 %v191, %v270
    %v272 = vmul.f32 %v192, %v270
    %v273 = vadd.f32 %v268, %v271
    %v274 = vadd.f32 %v269, %v272
    %v275 = vstv %s57
    %v276 = vmul.f32 %v214, %v275
    %v277 = vmul.f32 %v215, %v275
    %v278 = vadd.f32 %v273, %v276
    %v279 = vadd.f32 %v274, %v277
    %v280 = vstv %s58
    %v281 = vmul.f32 %v237, %v280
    %v282 = vmul.f32 %v238, %v280
    %v283 = vadd.f32 %v278, %v281
    %v284 = vadd.f32 %v279, %v282
    %v285 = vstv %s59
    %v286 = vmul.f32 %v260, %v285
    %v287 = vmul.f32 %v261, %v285
    %v288 = vadd.f32 %v283, %v286
    %v289 = vadd.f32 %v284, %v287
    %v290 = vstv %s90
    %v291 = vadd.f32 %v288, %v290
    %v292 = vadd.f32 %v289, %v290
    %v293 = vmax.f32 %v291, 0.0
    %v294 = vmax.f32 %v292, 0.0
    %v295 = vstv %s60
    %v296 = vmul.f32 %v145, %v295
    %v297 = vmul.f32 %v146, %v295
    %v298 = vstv %s61
    %v299 = vmul.f32 %v168, %v298
    %v300 = vmul.f32 %v169, %v298
    %v301 = vadd.f32 %v296, %v299
    %v302 = vadd.f32 %v297, %v300
    %v303 = vstv %s62
    %v304 = vmul.f32 %v191, %v303
    %v305 = vmul.f32 %v192, %v303
    %v306 = vadd.f32 %v301, %v304
    %v307 = vadd.f32 %v302, %v305
    %v308 = vstv %s63
    %v309 = vmul.f32 %v214, %v308
    %v310 = vmul.f32 %v215, %v308
    %v311 = vadd.f32 %v306, %v309
    %v312 = vadd.f32 %v307, %v310
    %v313 = vstv %s64
    %v314 = vmul.f32 %v237, %v313
    %v315 = vmul.f32 %v238, %v313
    %v316 = vadd.f32 %v311, %v314
    %v317 = vadd.f32 %v312, %v315
    %v318 = vstv %s65
    %v319 = vmul.f32 %v260, %v318
    %v320 = vmul.f32 %v261, %v318
    %v321 = vadd.f32 %v316, %v319
    %v322 = vadd.f32 %v317, %v320
    %v323 = vstv %s91
    %v324 = vadd.f32 %v321, %v323
    %v325 = vadd.f32 %v322, %v323
    %v326 = vmax.f32 %v324, 0.0
    %v327 = vmax.f32 %v325, 0.0
    %v328 = vstv %s66
    %v329 = vmul.f32 %v145, %v328
    %v330 = vmul.f32 %v146, %v328
    %v331 = vstv %s67
    %v332 = vmul.f32 %v168, %v331
    %v333 = vmul.f32 %v169, %v331
    %v334 = vadd.f32 %v329, %v332
    %v335 = vadd.f32 %v330, %v333
    %v336 = vstv %s68
    %v337 = vmul.f32 %v191, %v336
    %v338 = vmul.f32 %v192, %v336
    %v339 = vadd.f32 %v334, %v337
    %v340 = vadd.f32 %v335, %v338
    %v341 = vstv %s69
    %v342 = vmul.f32 %v214, %v341
    %v343 = vmul.f32 %v215, %v341
    %v344 = vadd.f32 %v339, %v342
    %v345 = vadd.f32 %v340, %v343
    %v346 = vstv %s70
    %v347 = vmul.f32 %v237, %v346
    %v348 = vmul.f32 %v238, %v346
    %v349 = vadd.f32 %v344, %v347
    %v350 = vadd.f32 %v345, %v348
    %v351 = vstv %s71
    %v352 = vmul.f32 %v260, %v351
    %v353 = vmul.f32 %v261, %v351
    %v354 = vadd.f32 %v349, %v352
    %v355 = vadd.f32 %v350, %v353
    %v356 = vstv %s92
    %v357 = vadd.f32 %v354, %v356
    %v358 = vadd.f32 %v355, %v356
    %v359 = vmax.f32 %v357, 0.0
    %v360 = vmax.f32 %v358, 0.0
    %v361 = vstv %s72
    %v362 = vmul.f32 %v145, %v361
    %v363 = vmul.f32 %v146, %v361
    %v364 = vstv %s73
    %v365 = vmul.f32 %v168, %v364
    %v366 = vmul.f32 %v169, %v364
    %v367 = vadd.f32 %v362, %v365
    %v368 = vadd.f32 %v363, %v366
    %v369 = vstv %s74
    %v370 = vmul.f32 %v191, %v369
    %v371 = vmul.f32 %v192, %v369
    %v372 = vadd.f32 %v367, %v370
    %v373 = vadd.f32 %v368, %v371
    %v374 = vstv %s75
    %v375 = vmul.f32 %v214, %v374
    %v376 = vmul.f32 %v215, %v374
    %v377 = vadd.f32 %v372, %v375
    %v378 = vadd.f32 %v373, %v376
    %v379 = vstv %s76
    %v380 = vmul.f32 %v237, %v379
    %v381 = vmul.f32 %v238, %v379
    %v382 = vadd.f32 %v377, %v380
    %v383 = vadd.f32 %v378, %v381
    %v384 = vstv %s77
    %v385 = vmul.f32 %v260, %v384
    %v386 = vmul.f32 %v261, %v384
    %v387 = vadd.f32 %v382, %v385
    %v388 = vadd.f32 %v383, %v386
    %v389 = vstv %s93
    %v390 = vadd.f32 %v387, %v389
    %v391 = vadd.f32 %v388, %v389
    %v392 = vmax.f32 %v390, 0.0
    %v393 = vmax.f32 %v391, 0.0
    %v394 = vstv %s78
    %v395 = vmul.f32 %v145, %v394
    %v396 = vmul.f32 %v146, %v394
    %v397 = vstv %s79
    %v398 = vmul.f32 %v168, %v397
    %v399 = vmul.f32 %v169, %v397
    %v400 = vadd.f32 %v395, %v398
    %v401 = vadd.f32 %v396, %v399
    %v402 = vstv %s80
    %v403 = vmul.f32 %v191, %v402
    %v404 = vmul.f32 %v192, %v402
    %v405 = vadd.f32 %v400, %v403
    %v406 = vadd.f32 %v401, %v404
    %v407 = vstv %s81
    %v408 = vmul.f32 %v214, %v407
    %v409 = vmul.f32 %v215, %v407
    %v410 = vadd.f32 %v405, %v408
    %v411 = vadd.f32 %v406, %v409
    %v412 = vstv %s82
    %v413 = vmul.f32 %v237, %v412
    %v414 = vmul.f32 %v238, %v412
    %v415 = vadd.f32 %v410, %v413
    %v416 = vadd.f32 %v411, %v414
    %v417 = vstv %s83
    %v418 = vmul.f32 %v260, %v417
    %v419 = vmul.f32 %v261, %v417
    %v420 = vadd.f32 %v415, %v418
    %v421 = vadd.f32 %v416, %v419
    %v422 = vstv %s94
    %v423 = vadd.f32 %v420, %v422
    %v424 = vadd.f32 %v421, %v422
    %v425 = vmax.f32 %v423, 0.0
    %v426 = vmax.f32 %v424, 0.0
    %v427 = vstv %s84
    %v428 = vmul.f32 %v145, %v427
    %v429 = vmul.f32 %v146, %v427
    %v430 = vstv %s85
    %v431 = vmul.f32 %v168, %v430
    %v432 = vmul.f32 %v169, %v430
    %v433 = vadd.f32 %v428, %v431
    %v434 = vadd.f32 %v429, %v432
    %v435 = vstv %s86
    %v436 = vmul.f32 %v191, %v435
    %v437 = vmul.f32 %v192, %v435
    %v438 = vadd.f32 %v433, %v436
    %v439 = vadd.f32 %v434, %v437
    %v440 = vstv %s87
    %v441 = vmul.f32 %v214, %v440
    %v442 = vmul.f32 %v215, %v440
    %v443 = vadd.f32 %v438, %v441
    %v444 = vadd.f32 %v439, %v442
    %v445 = vstv %s88
    %v446 = vmul.f32 %v237, %v445
    %v447 = vmul.f32 %v238, %v445
    %v448 = vadd.f32 %v443, %v446
    %v449 = vadd.f32 %v444, %v447
    %v450 = vstv %s89
    %v451 = vmul.f32 %v260, %v450
    %v452 = vmul.f32 %v261, %v450
    %v453 = vadd.f32 %v448, %v451
    %v454 = vadd.f32 %v449, %v452
    %v455 = vstv %s95
    %v456 = vadd.f32 %v453, %v455
    %v457 = vadd.f32 %v454, %v455
    %v458 = vmax.f32 %v456, 0.0
    %v459 = vmax.f32 %v457, 0.0
    %v460 = vstv %s96
    %v461 = vmul.f32 %v293, %v460
    %v462 = vmul.f32 %v294, %v460
    %v463 = vstv %s97
    %v464 = vmul.f32 %v326, %v463
    %v465 = vmul.f32 %v327, %v463
    %v466 = vadd.f32 %v461, %v464
    %v467 = vadd.f32 %v462, %v465
    %v468 = vstv %s98
    %v469 = vmul.f32 %v359, %v468
    %v470 = vmul.f32 %v360, %v468
    %v471 = vadd.f32 %v466, %v469
    %v472 = vadd.f32 %v467, %v470
    %v473 = vstv %s99
    %v474 = vmul.f32 %v392, %v473
    %v475 = vmul.f32 %v393, %v473
    %v476 = vadd.f32 %v471, %v474
    %v477 = vadd.f32 %v472, %v475
    %v478 = vstv %s100
    %v479 = vmul.f32 %v425, %v478
    %v480 = vmul.f32 %v426, %v478
    %v481 = vadd.f32 %v476, %v479
    %v482 = vadd.f32 %v477, %v480
    %v483 = vstv %s101
    %v484 = vmul.f32 %v458, %v483
    %v485 = vmul.f32 %v459, %v483
    %v486 = vadd.f32 %v481, %v484
    %v487 = vadd.f32 %v482, %v485
    %v488 = vstv %s108
    %v489 = vadd.f32 %v486, %v488
    %v490 = vadd.f32 %v487, %v488
    %v491 = vstv %s102
    %v492 = vmul.f32 %v293, %v491
    %v493 = vmul.f32 %v294, %v491
    %v494 = vstv %s103
    %v495 = vmul.f32 %v326, %v494
    %v496 = vmul.f32 %v327, %v494
    %v497 = vadd.f32 %v492, %v495
    %v498 = vadd.f32 %v493, %v496
    %v499 = vstv %s104
    %v500 = vmul.f32 %v359, %v499
    %v501 = vmul.f32 %v360, %v499
    %v502 = vadd.f32 %v497, %v500
    %v503 = vadd.f32 %v498, %v501
    %v504 = vstv %s105
    %v505 = vmul.f32 %v392, %v504
    %v506 = vmul.f32 %v393, %v504
    %v507 = vadd.f32 %v502, %v505
    %v508 = vadd.f32 %v503, %v506
    %v509 = vstv %s106
    %v510 = vmul.f32 %v425, %v509
    %v511 = vmul.f32 %v426, %v509
    %v512 = vadd.f32 %v507, %v510
    %v513 = vadd.f32 %v508, %v511
    %v514 = vstv %s107
    %v515 = vmul.f32 %v458, %v514
    %v516 = vmul.f32 %v459, %v514
    %v517 = vadd.f32 %v512, %v515
    %v518 = vadd.f32 %v513, %v516
    %v519 = vstv %s109
    %v520 = vadd.f32 %v517, %v519
    %v521 = vadd.f32 %v518, %v519
    %522 = vst [vmem:[%s2] sm:$0xff] %v489
    %523 = vst [vmem:[%s2 + $0x8] sm:$0xff] %v490
    %s524 = scalar_lea.vmem %s2, %s112
    %525 = vst [vmem:[%s524] sm:$0xff] %v520
    %526 = vst [vmem:[%s524 + $0x8] sm:$0xff] %v521
    // Predicated region
    $region14: #{dqn_forward.1} parent=1 // pred_check
      _
    $region15: #{dqn_forward.1} parent=1 // pred_check_branch
      %528 = sbr.rel (0) target = $region17
    $region16: #{dqn_forward.1} parent=1 // pred_region
      _
    $region17: #{dqn_forward.1} parent=1 // pred_fallthru
      _
    // Predicated region
    $region18: #{dqn_forward.1} parent=1 // pred_check
      _
    $region19: #{dqn_forward.1} parent=1 // pred_check_branch
      %530 = sbr.rel (0) target = $region21
    $region20: #{dqn_forward.1} parent=1 // pred_region
      _
    $region21: #{dqn_forward.1} parent=1 // pred_fallthru
      _
    %531 = vsyncpa [#allocation3], 1

</llo_original>
